<compile_context>
chip_gen: v6e
topology: v6e:2x2x1
jax: 0.10.0
libtpu: 0.0.40
codegen_flags: <defaults>
</compile_context>

<pallas_src>
import jax
import jax.numpy as jnp
from jax.experimental import pallas as pl
from jax.experimental.pallas import tpu as pltpu

EPS = 1e-6
_FUSE_MAX_ROWS = 256   # decode / tiny-prefill rows handled by the fused kernel


def _round_up(x, m):
    return ((x + m - 1) // m) * m


# --------------------------------------------------------------------------
# Kernels
# --------------------------------------------------------------------------
def _rmsnorm_kernel(x_ref, g_ref, o_ref):
    # x_ref: (tm1, H) hidden rows, g_ref: (1, H) norm weight, o_ref: (tm1, H) bf16.
    x = x_ref[...].astype(jnp.float32)
    ms = jnp.mean(x * x, axis=-1, keepdims=True)
    xn = x * jax.lax.rsqrt(ms + EPS)
    xn = xn * (1.0 + g_ref[...].astype(jnp.float32))   # Gemma (1 + w) offset
    o_ref[...] = xn.astype(o_ref.dtype)


def _logits_matmul_kernel(xn_ref, w_ref, o_ref):
    # xn_ref: (tm, H) bf16 rows; w_ref: (H, tn) bf16 embedding tile (VMEM-resident
    # across the inner row loop); o_ref: (tm, tn) logits tile.  f32 accumulation.
    o_ref[...] = jnp.dot(
        xn_ref[...], w_ref[...], preferred_element_type=jnp.float32
    ).astype(o_ref.dtype)


def _fused_norm_matmul_kernel(x_ref, g_ref, w_ref, o_ref):
    # Decode / small-row path: the whole activation slab (rows_p, H) stays in
    # VMEM (constant block index -> fetched once); only the embedding streams.
    # Re-normalizing per vocab tile is VPU/EUP work hidden under the MXU.
    x = x_ref[...].astype(jnp.float32)
    ms = jnp.mean(x * x, axis=-1, keepdims=True)
    xn = x * jax.lax.rsqrt(ms + EPS) * (1.0 + g_ref[...].astype(jnp.float32))
    o_ref[...] = jnp.dot(
        xn.astype(w_ref.dtype), w_ref[...], preferred_element_type=jnp.float32
    ).astype(o_ref.dtype)


# --------------------------------------------------------------------------
# Tile / budget selection
# --------------------------------------------------------------------------
def _device_budgets():
    """(vmem_limit_bytes, max_vocab_tile) per TPU generation."""
    try:
        kind = jax.devices()[0].device_kind.lower()
    except Exception:
        kind = ""
    if "v7" in kind:
        return 56 * 1024 * 1024, 2048    # 64 MiB physical per TC: do NOT copy the v6e config
    if "v5" in kind or "v6" in kind:
        return 100 * 1024 * 1024, 4096   # 128 MiB physical VMEM
    return 56 * 1024 * 1024, 2048        # unknown: conservative, safe everywhere


def _pick_row_tile(rows, max_tm):
    """Power-of-two row tile (>=8) minimizing padded rows; prefer bigger on ties."""
    best_cand, best_key = 8, None
    for cand in (512, 256, 128, 64, 32, 16, 8):
        if cand > max_tm:
            continue
        key = (_round_up(rows, cand) - rows, -cand)
        if best_key is None or key < best_key:
            best_cand, best_key = cand, key
    return best_cand


def _pick_vocab_tile(v_cols, max_tn, fits):
    """Largest multiple-of-128 divisor of v_cols that is <= max_tn and fits VMEM."""
    u = v_cols // 128
    d = min(max(max_tn // 128, 1), u)
    while d > 1:
        if u % d == 0 and fits(d * 128):
            return d * 128
        d -= 1
    return 128


def prepare_logits_weight(emb_weight_t):
    """One-time (init-side) bf16 cast + 128-lane pad of the [H, V] embedding.

    Doing this per forward call adds a full read+write pass over the (~GB)
    embedding before the kernel even starts, so it is hoisted out of the hot path.
    """
    _, V = emb_weight_t.shape
    w = emb_weight_t.astype(jnp.bfloat16)
    v_cols = _round_up(V, 128)
    if v_cols != V:
        w = jnp.pad(w, ((0, 0), (0, v_cols - V)))
    return w


# --------------------------------------------------------------------------
# Forward wrapper
# --------------------------------------------------------------------------
def fnorm_pipeline_layer(hidden_states, norm_weight, emb_weight_t, labels, *,
                         vocab_size=None, logits_dtype=None,
                         tm=None, tn=None, vmem_limit_bytes=None):
    """hidden_states: [B,S,H]; norm_weight: [H]; emb_weight_t: [H,V] (ideally the
    output of prepare_logits_weight); labels: passthrough.  Returns (logits, labels)."""
    B, S, H = hidden_states.shape
    Hw, v_stored = emb_weight_t.shape
    assert H == Hw
    rows = B * S
    V = int(vocab_size) if vocab_size is not None else v_stored
    out_dtype = logits_dtype if logits_dtype is not None else hidden_states.dtype
    out_bytes = jnp.dtype(out_dtype).itemsize
    x_bytes = jnp.dtype(hidden_states.dtype).itemsize

    default_vmem, default_max_tn = _device_budgets()
    vmem_limit = int(vmem_limit_bytes) if vmem_limit_bytes else default_vmem
    budget = int(vmem_limit * 0.9)   # headroom for Mosaic internal scratch

    # Per-call fallback only if the caller didn't pre-prepare the weight.
    w = emb_weight_t
    if w.dtype != jnp.bfloat16:
        w = w.astype(jnp.bfloat16)
    v_cols = _round_up(w.shape[1], 128)
    if v_cols != w.shape[1]:
        w = jnp.pad(w, ((0, 0), (0, v_cols - w.shape[1])))

    g2d = norm_weight.reshape(1, H)
    x2d = hidden_states.reshape(rows, H)

    max_tn = int(tn) if tn else default_max_tn
    max_tm = int(tm) if tm else 512

    rows_p8 = _round_up(rows, 8)
    fused_min_est = 2 * (rows_p8 * H * x_bytes + H * 128 * 2 + rows_p8 * 128 * out_bytes)
    use_fused = (rows_p8 <= _FUSE_MAX_ROWS) and (fused_min_est <= budget)

    if use_fused:
        # ------------- fused decode path: one kernel, activations resident -------------
        rows_p = rows_p8
        if rows_p != rows:
            x2d = jnp.pad(x2d, ((0, rows_p - rows), (0, 0)))

        def fused_fits(t):
            return 2 * (rows_p * H * x_bytes + H * t * 2 + rows_p * t * out_bytes) <= budget

        tn_sel = _pick_vocab_tile(v_cols, max_tn, fused_fits)

        logits2d = pl.pallas_call(
            _fused_norm_matmul_kernel,
            out_shape=jax.ShapeDtypeStruct((rows_p, v_cols), out_dtype),
            grid_spec=pltpu.PrefetchScalarGridSpec(
                num_scalar_prefetch=0,
                grid=(v_cols // tn_sel,),
                in_specs=[
                    pl.BlockSpec((rows_p, H), lambda j: (0, 0)),   # resident activations
                    pl.BlockSpec((1, H), lambda j: (0, 0)),        # norm weight
                    pl.BlockSpec((H, tn_sel), lambda j: (0, j)),   # streamed embedding
                ],
                out_specs=pl.BlockSpec((rows_p, tn_sel), lambda j: (0, j)),
            ),
            compiler_params=pltpu.CompilerParams(
                dimension_semantics=("parallel",),
                vmem_limit_bytes=vmem_limit,
            ),
        )(x2d, g2d, w)
    else:
        # ------------- two-stage prefill path -------------
        def s2_est(tm_, tn_):
            return 2 * (tm_ * H * 2 + H * tn_ * 2 + tm_ * tn_ * out_bytes)

        tm_sel = _pick_row_tile(rows, min(max_tm, rows_p8))
        tn_sel = _pick_vocab_tile(v_cols, max_tn, lambda t: s2_est(tm_sel, t) <= budget)
        while s2_est(tm_sel, tn_sel) > budget and tm_sel > 8:
            tm_sel //= 2
            tn_sel = _pick_vocab_tile(
                v_cols, max_tn, lambda t, _tm=tm_sel: s2_est(_tm, t) <= budget)

        rows_p = _round_up(rows, tm_sel)
        if rows_p != rows:
            # Zero rows normalize to zero (0 * rsqrt(eps) == 0) -> harmless pad.
            x2d = jnp.pad(x2d, ((0, rows_p - rows), (0, 0)))

        # Stage 1 is memory-bound: use the biggest row tile that divides rows_p.
        tm1 = tm_sel
        while (tm1 * 2 <= min(1024, rows_p) and rows_p % (tm1 * 2) == 0
               and 2 * (tm1 * 2) * H * (x_bytes + 2) <= budget):
            tm1 *= 2

        xn = pl.pallas_call(
            _rmsnorm_kernel,
            out_shape=jax.ShapeDtypeStruct((rows_p, H), jnp.bfloat16),
            grid_spec=pltpu.PrefetchScalarGridSpec(
                num_scalar_prefetch=0,
                grid=(rows_p // tm1,),
                in_specs=[
                    pl.BlockSpec((tm1, H), lambda i: (i, 0)),   # hidden rows
                    pl.BlockSpec((1, H), lambda i: (0, 0)),     # norm weight
                ],
                out_specs=pl.BlockSpec((tm1, H), lambda i: (i, 0)),
            ),
            compiler_params=pltpu.CompilerParams(
                dimension_semantics=("parallel",),
                vmem_limit_bytes=vmem_limit,
            ),
        )(x2d, g2d)

        # Stage 2: vocab axis OUTER so the (H, tn) embedding tile stays resident
        # across the inner row loop; vocab marked "parallel" so a v7x megacore
        # can split V between its two TensorCores.
        # TODO(synk): if a v7x profile shows the vocab axis is NOT actually split
        # across cores, add an explicit leading grid axis of size 2 over V.
        # TODO(synk): decode-only deployments can store int8 (v5e/v6e) / fp8 (v7x)
        # embeddings with a per-column scale epilogue to halve weight HBM bytes.
        logits2d = pl.pallas_call(
            _logits_matmul_kernel,
            out_shape=jax.ShapeDtypeStruct((rows_p, v_cols), out_dtype),
            grid_spec=pltpu.PrefetchScalarGridSpec(
                num_scalar_prefetch=0,
                grid=(v_cols // tn_sel, rows_p // tm_sel),
                in_specs=[
                    pl.BlockSpec((tm_sel, H), lambda j, i: (i, 0)),   # normalized rows
                    pl.BlockSpec((H, tn_sel), lambda j, i: (0, j)),   # embedding cols
                ],
                out_specs=pl.BlockSpec((tm_sel, tn_sel), lambda j, i: (i, j)),
            ),
            compiler_params=pltpu.CompilerParams(
                dimension_semantics=("parallel", "arbitrary"),
                vmem_limit_bytes=vmem_limit,
            ),
        )(xn, w)

    if rows_p != rows or v_cols != V:
        # Only materializes a copy when padding was unavoidable (rows not a tile
        # multiple or vocab not 128-aligned).  Common Gemma shapes avoid it.
        logits2d = logits2d[:rows, :V]
    logits = logits2d.reshape(B, S, V)
    return (logits, labels)


# --------------------------------------------------------------------------
# Reference + self-test
# --------------------------------------------------------------------------
def _reference(hidden_states, norm_weight, emb_weight_t):
    x = hidden_states.astype(jnp.float32)
    ms = jnp.mean(x * x, axis=-1, keepdims=True)
    xn = x * jax.lax.rsqrt(ms + EPS) * (1.0 + norm_weight.astype(jnp.float32))
    return jnp.einsum("bsh,hv->bsv", xn,
                      emb_weight_t.astype(jnp.float32)).astype(hidden_states.dtype)


if __name__ == "__main__":
    key = jax.random.PRNGKey(0)
    ks = jax.random.split(key, 8)

    def make_inputs(keys, B, S, H, V):
        hidden = jax.random.normal(keys[0], (B, S, H), dtype=jnp.float32)
        # Gemma's final-norm weight initializes to zeros; perturb so (1 + w) matters.
        norm_w = 0.1 * jax.random.normal(keys[1], (H,), dtype=jnp.float32)
        # model.embedder.weight is [V, H]; the module stores its transpose [H, V].
        emb = jax.random.normal(keys[2], (V, H), dtype=jnp.float32) * (H ** -0.5)
        labels = jax.random.randint(keys[3], (B, S), 0, V, dtype=jnp.int32)
        return hidden, norm_w, emb.T, labels

    # Case 1: decode-sized rows -> fused single-kernel path.
    B, S, H, V = 2, 8, 32, 256
    hs, nw, wt, lb = make_inputs(ks[:4], B, S, H, V)
    w_prep = prepare_logits_weight(wt)                     # one-time init-side cast/pad
    logits, out_labels = fnorm_pipeline_layer(hs, nw, w_prep, lb, vocab_size=V)
    jax.block_until_ready(logits)
    ref = _reference(hs, nw, wt)
    assert logits.shape == (B, S, V) and out_labels.shape == (B, S)
    assert jnp.allclose(logits, ref, atol=5e-2, rtol=5e-2), (
        float(jnp.max(jnp.abs(logits - ref))))

    # Case 2: larger row count -> two-stage (RMSNorm kernel + weight-resident matmul).
    B2, S2 = 2, 160
    hs2, nw2, wt2, lb2 = make_inputs(ks[4:], B2, S2, H, V)
    w_prep2 = prepare_logits_weight(wt2)
    logits2, _ = fnorm_pipeline_layer(hs2, nw2, w_prep2, lb2, vocab_size=V)
    jax.block_until_ready(logits2)
    ref2 = _reference(hs2, nw2, wt2)
    assert logits2.shape == (B2, S2, V)
    assert jnp.allclose(logits2, ref2, atol=5e-2, rtol=5e-2), (
        float(jnp.max(jnp.abs(logits2 - ref2))))

    print("KERNEL_OK")
</pallas_src>

<mosaic_0001>
module attributes {stable_mosaic.version = 11 : i64} {
  func.func @_fused_norm_matmul_kernel(%arg0: i32, %arg1: memref<16x32xf32, #tpu.memory_space<vmem>>, %arg2: memref<1x32xf32, #tpu.memory_space<vmem>>, %arg3: memref<32x256xbf16, #tpu.memory_space<vmem>>, %arg4: memref<16x256xf32, #tpu.memory_space<vmem>>) attributes {dimension_semantics = [#tpu.dimension_semantics<parallel>], iteration_bounds = array<i64: 1>, scalar_prefetch = 0 : i64, scratch_operands = 0 : i64, tpu.core_type = #tpu.core_type<tc>, window_params = [{pipeline_mode = #tpu.pipeline_mode<synchronous>, transform_indices = @transform_0, window_bounds = array<i64: 16, 32>}, {pipeline_mode = #tpu.pipeline_mode<synchronous>, transform_indices = @transform_1, window_bounds = array<i64: 1, 32>}, {transform_indices = @transform_2, window_bounds = array<i64: 32, 256>}, {transform_indices = @transform_3, window_bounds = array<i64: 16, 256>}]} {
    %c0 = arith.constant 0 : index
    %c0_0 = arith.constant 0 : index
    %0 = vector.load %arg1[%c0, %c0_0] : memref<16x32xf32, #tpu.memory_space<vmem>>, vector<16x32xf32>
    %1 = arith.mulf %0, %0 : vector<16x32xf32>
    %cst = arith.constant dense<0.000000e+00> : vector<16xf32>
    %2 = vector.multi_reduction <add>, %1, %cst [1] : vector<16x32xf32> to vector<16xf32>
    %3 = vector.shape_cast %2 : vector<16xf32> to vector<16x1xf32>
    %cst_1 = arith.constant 3.200000e+01 : f32
    %4 = vector.broadcast %cst_1 : f32 to vector<16x1xf32>
    %5 = arith.divf %3, %4 : vector<16x1xf32>
    %cst_2 = arith.constant 9.99999997E-7 : f32
    %6 = vector.broadcast %cst_2 : f32 to vector<16x1xf32>
    %7 = arith.addf %5, %6 : vector<16x1xf32>
    %8 = math.rsqrt %7 : vector<16x1xf32>
    %9 = vector.broadcast %8 : vector<16x1xf32> to vector<16x32xf32>
    %10 = arith.mulf %0, %9 : vector<16x32xf32>
    %c0_3 = arith.constant 0 : index
    %c0_4 = arith.constant 0 : index
    %11 = vector.load %arg2[%c0_3, %c0_4] : memref<1x32xf32, #tpu.memory_space<vmem>>, vector<1x32xf32>
    %cst_5 = arith.constant 1.000000e+00 : f32
    %12 = vector.broadcast %cst_5 : f32 to vector<1x32xf32>
    %13 = arith.addf %12, %11 : vector<1x32xf32>
    %14 = vector.broadcast %13 : vector<1x32xf32> to vector<16x32xf32>
    %15 = arith.mulf %10, %14 : vector<16x32xf32>
    %16 = arith.truncf %15 : vector<16x32xf32> to vector<16x32xbf16>
    %c0_6 = arith.constant 0 : index
    %c0_7 = arith.constant 0 : index
    %17 = vector.load %arg3[%c0_6, %c0_7] : memref<32x256xbf16, #tpu.memory_space<vmem>>, vector<32x256xbf16>
    %cst_8 = arith.constant dense<0.000000e+00> : vector<16x256xf32>
    %18 = tpu.matmul %16, %17, %cst_8 {dimension_numbers = #tpu.dot_dimension_numbers<[1], [0], [0], [1], [0, 0, 1, 1], [], []>} : vector<16x32xbf16>, vector<32x256xbf16>, vector<16x256xf32> -> vector<16x256xf32>
    %c0_9 = arith.constant 0 : index
    %c0_10 = arith.constant 0 : index
    %19 = vector.load %arg4[%c0_9, %c0_10] : memref<16x256xf32, #tpu.memory_space<vmem>>, vector<16x256xf32>
    tpu.vector_store %arg4[%c0_9, %c0_10], %18 {strides = array<i32>} : memref<16x256xf32, #tpu.memory_space<vmem>>, vector<16x256xf32>,
    return
  }
  func.func @transform_0(%arg0: i32) -> (i32, i32) {
    %c0_i32 = arith.constant 0 : i32
    %c0_i32_0 = arith.constant 0 : i32
    %c0_i32_1 = arith.constant 0 : i32
    return %c0_i32, %c0_i32_0 : i32, i32
  }
  func.func @transform_1(%arg0: i32) -> (i32, i32) {
    %c0_i32 = arith.constant 0 : i32
    %c0_i32_0 = arith.constant 0 : i32
    %c0_i32_1 = arith.constant 0 : i32
    return %c0_i32, %c0_i32_0 : i32, i32
  }
  func.func @transform_2(%arg0: i32) -> (i32, i32) {
    %c0_i32 = arith.constant 0 : i32
    %c0_i32_0 = arith.constant 0 : i32
    return %c0_i32, %arg0 : i32, i32
  }
  func.func @transform_3(%arg0: i32) -> (i32, i32) {
    %c0_i32 = arith.constant 0 : i32
    %c0_i32_0 = arith.constant 0 : i32
    return %c0_i32, %arg0 : i32, i32
  }
}

</mosaic_0001>

<llo_original>
// kernel: tpu_custom_call.1
$region0: #{tpu_custom_call.1}
  #allocation0 [shape = 'u32[]', space=smem, size = 0x4, offset = 0x4, fixed_abs, tag = 'smem constant byte address 0x4 - core index']
  #allocation1 [shape = 'u32[144,128]{1,0:T(1,128)}', space=vmem, size = 0x12000, scoped, tag = 'internal scratch']
  %s0 = inlined_call_operand.hbm [shape: f32[16,32], index: 0, kind: input, shape index: {}]
  %s1 = inlined_call_operand.vmem [shape: f32[1,32], index: 1, kind: input, shape index: {}]
  %s2 = inlined_call_operand.hbm [shape: bf16[32,256], index: 2, kind: input, shape index: {}]
  %s3 = inlined_call_operand.hbm [shape: f32[16,256], index: 3, kind: output, shape index: {}]
  %s4 = sld [smem:[#allocation0]]
  $region30: #{tpu_custom_call.1} parent=0
    _
  %s6 = ssub.s32 1, %s4
  %s7 = scalar_select 0, %s6, %s4
  $region1: #{tpu_custom_call.1} parent=0
    #allocation2 [shape = 'u8[8192]{0}', space=vmem, size = 0x2000, scoped, tag = 'input window, operand 0, single buffered']
    #allocation3 [shape = 's32[1]{0}', space=sflag, size = 0x4, scoped, tag = 'scoped memory for tpu_custom_call.1']
    #allocation4 [shape = 's32[1]{0}', space=sflag, size = 0x4, scoped, tag = 'scoped memory for tpu_custom_call.1']
    #allocation5 [shape = 'u8[16384]{0}', space=vmem, size = 0x4000, scoped, tag = 'input window, operand 2, single buffered']
    #allocation6 [shape = 's32[1]{0}', space=sflag, size = 0x4, scoped, tag = 'scoped memory for tpu_custom_call.1']
    #allocation7 [shape = 'u8[16384]{0}', space=vmem, size = 0x4000, scoped, tag = 'output window, operand 0, single buffered']
    %8 = vsyncpa [#allocation3], 0
    %9 = vsyncpa [#allocation6], 0
    %10 = vsyncpa [#allocation4], 0
    // Predicated region
    $region2: #{tpu_custom_call.1} parent=1 // pred_check
      _
    $region3: #{tpu_custom_call.1} parent=1 // pred_check_branch
      %12 = sbr.rel (0) target = $region5
    $region4: #{tpu_custom_call.1} parent=1 // pred_region
      %s14 = ssub.s32 256, 256
      %15 = vsyncadd [#allocation3], %s14
      %s16 = sshll.u32 [#allocation2], 4
      %s17 = int_to_ptr.vmem [resolvable:$true] %s16
      %22 = dma.hbm_to_vmem [thread:$0]  %s0, 256, %s17, [#allocation3], 128, 128, 8
    $region5: #{tpu_custom_call.1} parent=1 // pred_fallthru
      _
    // Predicated region
    $region6: #{tpu_custom_call.1} parent=1 // pred_check
      _
    $region7: #{tpu_custom_call.1} parent=1 // pred_check_branch
      %24 = sbr.rel (0) target = $region9
    $region8: #{tpu_custom_call.1} parent=1 // pred_region
      _
    $region9: #{tpu_custom_call.1} parent=1 // pred_fallthru
      _
    // Predicated region
    $region10: #{tpu_custom_call.1} parent=1 // pred_check
      _
    $region11: #{tpu_custom_call.1} parent=1 // pred_check_branch
      %26 = sbr.rel (0) target = $region13
    $region12: #{tpu_custom_call.1} parent=1 // pred_region
      %s28 = ssub.s32 512, 512
      %29 = vsyncadd [#allocation6], %s28
      %s30 = sshll.u32 [#allocation5], 4
      %s31 = int_to_ptr.vmem [resolvable:$true] %s30
      %36 = dma.hbm_to_vmem [thread:$0]  %s2, 512, %s31, [#allocation6], 128, 128, 8
    $region13: #{tpu_custom_call.1} parent=1 // pred_fallthru
      _
    // Predicated region
    $region14: #{tpu_custom_call.1} parent=1 // pred_check
      _
    $region15: #{tpu_custom_call.1} parent=1 // pred_check_branch
      %38 = sbr.rel (0) target = $region17
    $region16: #{tpu_custom_call.1} parent=1 // pred_region
      %39 = dma.done [#allocation3], 256
    $region17: #{tpu_custom_call.1} parent=1 // pred_fallthru
      _
    // Predicated region
    $region18: #{tpu_custom_call.1} parent=1 // pred_check
      _
    $region19: #{tpu_custom_call.1} parent=1 // pred_check_branch
      %41 = sbr.rel (0) target = $region21
    $region20: #{tpu_custom_call.1} parent=1 // pred_region
      %42 = dma.done [#allocation6], 512
    $region21: #{tpu_custom_call.1} parent=1 // pred_fallthru
      _
    %v44 = vld [vmem:[#allocation2] sm:$0xff]
    %v45 = vld [vmem:[#allocation2 + $0x8] sm:$0xff]
    %v46 = vmul.f32 %v44, %v44
    %v47 = vmul.f32 %v45, %v45
    %vm48 = vcmask 261120
    %v49 = vsel %vm48, %v46, 0.0
    %50 = vadd.xlane.f32.xlu0 %v49
    %v51 = vpop.xlane.xlu0 %50
    %v52 = vsel %vm48, %v47, 0.0
    %53 = vadd.xlane.f32.xlu0 %v52
    %v54 = vpop.xlane.xlu0 %53
    %v55 = vrcp.pop 32.0
    %v56 = vmul.f32 %v51, %v55
    %v57 = vmul.f32 %v54, %v55
    %v58 = vadd.f32 %v56, 1e-06
    %v59 = vadd.f32 %v57, 1e-06
    %v60 = vrsqrt.pop %v58
    %v61 = vrsqrt.pop %v59
    %v62 = vmul.f32 %v44, %v60
    %v63 = vmul.f32 %v45, %v61
    %v64 = vld [vmem:[%s1] sm:$0x1]
    %v65 = vadd.f32 %v64, 1.0
    %v67 = vlaneseq
    %v68 = vshrl.u32 %v67, 7
    %v69 = vsub.s32 0, %v68
    %v70 = vrot.slane %v65, %v69
    %v72 = vmul.f32 %v62, %v70
    %v73 = vmul.f32 %v63, %v70
    %v74 = vpack.c.bf16 %v73, %v72
    %v75 = vld [vmem:[#allocation5] sm:$0xff]
    %v76 = vld [vmem:[#allocation5 + $0x8] sm:$0xff]
    %v77 = vld [vmem:[#allocation5 + $0x10] sm:$0xff]
    %v78 = vld [vmem:[#allocation5 + $0x18] sm:$0xff]
    %v83 = vunpack.c.l.b16 %v75
    %v84 = vunpack.c.h.b16 %v75
    %v85 = vunpack.c.l.b16 %v76
    %v86 = vunpack.c.h.b16 %v76
    %v87 = vunpack.c.l.b16 %v77
    %v88 = vunpack.c.h.b16 %v77
    %v89 = vunpack.c.l.b16 %v78
    %v90 = vunpack.c.h.b16 %v78
    %v91 = vpack.c.b16 %v85, %v83
    %v92 = vpack.c.b16 %v86, %v84
    %v93 = vpack.c.b16 %v89, %v87
    %v94 = vpack.c.b16 %v90, %v88
    %v100 = vsel %vm48, %v74, 0
    %102 = vmatprep.subr.bf16.mxu0 0
    %103 = vmatpush1.bf16.msra.mxu0 0
    %104 = vmatprep.subr.bf16.mxu0 0
    %105 = vmatpush1.bf16.msra.mxu0 0
    %106 = vmatprep.subr.bf16.mxu0 0
    %107 = vmatpush1.bf16.msra.mxu0 0
    %108 = vmatprep.subr.bf16.mxu0 0
    %109 = vmatpush1.bf16.msra.mxu0 0
    %110 = vmatprep.subr.bf16.mxu0 0
    %111 = vmatpush1.bf16.msra.mxu0 0
    %112 = vmatprep.subr.bf16.mxu0 0
    %113 = vmatpush1.bf16.msra.mxu0 0
    %114 = vmatprep.subr.bf16.mxu0 %v94
    %115 = vmatpush1.bf16.msra.mxu0 %v93
    %116 = vmatprep.subr.bf16.mxu0 %v92
    %117 = vmatpush1.bf16.msra.mxu0 %v91
    %118 = vmatprep.subr.bf16.mxu0 0
    %119 = vmatpush2.bf16.msra.mxu0 0
    %120 = vmatprep.subr.bf16.mxu0 0
    %121 = vmatpush2.bf16.msra.mxu0 0
    %122 = vmatprep.subr.bf16.mxu0 0
    %123 = vmatpush2.bf16.msra.mxu0 0
    %124 = vmatprep.subr.bf16.mxu0 0
    %125 = vmatpush2.bf16.msra.mxu0 0
    %126 = vmatprep.subr.bf16.mxu0 0
    %127 = vmatpush2.bf16.msra.mxu0 0
    %128 = vmatprep.subr.bf16.mxu0 0
    %129 = vmatpush2.bf16.msra.mxu0 0
    %130 = vmatprep.subr.bf16.mxu0 0
    %131 = vmatpush2.bf16.msra.mxu0 0
    %132 = vmatprep.subr.bf16.mxu0 0
    %133 = vmatpush2.bf16.msra.mxu0 0
    %134 = vmatprep.mubr.bf16.mxu0 0
    %135 = vmatmul.mubr.bf16.gmra.mxu0 %v100
    %v136 = vpop.f32.mrf.mxu0
    %v137 = vadd.f32 0.0, %v136
    %v138 = vpop.f32.mrf.mxu0
    %v139 = vadd.f32 0.0, %v138
    %v140 = vpop.f32.mrf.mxu0
    %v141 = vadd.f32 0.0, %v140
    %v142 = vpop.f32.mrf.mxu0
    %v143 = vadd.f32 0.0, %v142
    %144 = vdwg.mxu0
    %145 = vst [vmem:[#allocation7] sm:$0xff] %v137
    %146 = vst [vmem:[#allocation7 + $0x8] sm:$0xff] %v139
    %147 = vst [vmem:[#allocation7 + $0x10] sm:$0xff] %v141
    %148 = vst [vmem:[#allocation7 + $0x18] sm:$0xff] %v143
    // Predicated region
    $region22: #{tpu_custom_call.1} parent=1 // pred_check
      _
    $region23: #{tpu_custom_call.1} parent=1 // pred_check_branch
      %150 = sbr.rel (0) target = $region25
    $region24: #{tpu_custom_call.1} parent=1 // pred_region
      %s152 = ssub.s32 512, 512
      %153 = vsyncadd [#allocation4], %s152
      %s154 = sshll.u32 [#allocation7], 4
      %s155 = int_to_ptr.vmem [resolvable:$true] %s154
      %160 = dma.vmem_to_hbm [thread:$0]  %s155, 512, %s3, [#allocation4], 256, 256, 16
    $region25: #{tpu_custom_call.1} parent=1 // pred_fallthru
      _
    // Predicated region
    $region26: #{tpu_custom_call.1} parent=1 // pred_check
      _
    $region27: #{tpu_custom_call.1} parent=1 // pred_check_branch
      %162 = sbr.rel (0) target = $region29
    $region28: #{tpu_custom_call.1} parent=1 // pred_region
      %163 = dma.done [#allocation4], 512
    $region29: #{tpu_custom_call.1} parent=1 // pred_fallthru
      _
    %164 = vsyncpa [#allocation3], 1
    %165 = vsyncpa [#allocation6], 1
    %166 = vsyncpa [#allocation4], 1

</llo_original>
